<compile_context>
chip_gen: v7x
topology: tpu7x:2x2x1
jax: 0.10.0
libtpu: 0.0.40
codegen_flags: <defaults>
</compile_context>

<pallas_src>
import jax
import jax.numpy as jnp
from jax.experimental import pallas as pl
from jax.experimental.pallas import tpu as pltpu


def _round_up(x, m):
    return (x + m - 1) // m * m


def _embed_sum_kernel(idx_ref, hi_ref, lo_ref, out_ref):
    """idx: (TN, 3) int32, already offset into the fused table;
       hi/lo: (Vp, Dp) bf16 hi/lo split of the fused f32 [word; head; tail] table;
       out: (TN, Dp) f32 = sum of the three looked-up rows."""
    idx = idx_ref[...]                                        # (TN, 3)
    tn = idx.shape[0]
    vp = hi_ref.shape[0]
    # One shared iota for all three lookups (JAX does not CSE broadcasts).
    col = jax.lax.broadcasted_iota(jnp.int32, (tn, vp), 1)    # (TN, Vp)
    # The three index ranges are disjoint after offsetting, so OR builds an exact
    # 3-hot row. 0/1 is exact in bf16, so both matmuls run on the bf16-native MXU
    # path on v5e/v6e/v7x (~3x fewer passes than f32xf32, half the vld/vreg
    # pressure); hi+lo reconstructs the f32 table to ~|x|*2^-18.
    hot = ((col == idx[:, 0:1]) |
           (col == idx[:, 1:2]) |
           (col == idx[:, 2:3])).astype(jnp.bfloat16)         # (TN, Vp) bf16
    out_ref[...] = (
        jnp.dot(hot, hi_ref[...], preferred_element_type=jnp.float32)
        + jnp.dot(hot, lo_ref[...], preferred_element_type=jnp.float32))


def build_fused_tables(word_tab, head_tab, tail_tab):
    """Concatenate the three f32 tables along V, pad to (Vp, Dp) = (256, 128),
    and split into bf16 hi + bf16 lo halves for the bf16 MXU fast path."""
    v1, d = word_tab.shape
    v2 = head_tab.shape[0]
    v3 = tail_tab.shape[0]
    vp = _round_up(v1 + v2 + v3, 128)
    dp = _round_up(d, 128)
    tab = jnp.zeros((vp, dp), jnp.float32)
    tab = tab.at[:v1, :d].set(word_tab.astype(jnp.float32))
    tab = tab.at[v1:v1 + v2, :d].set(head_tab.astype(jnp.float32))
    tab = tab.at[v1 + v2:v1 + v2 + v3, :d].set(tail_tab.astype(jnp.float32))
    hi = tab.astype(jnp.bfloat16)
    lo = (tab - hi.astype(jnp.float32)).astype(jnp.bfloat16)
    return hi, lo


_TN_MAX = 1024  # large tiles amortize the ~0.35us/step grid overhead


def _pick_row_tile(n):
    """Row tile: big enough to amortize grid overhead, but always leaving >= 2
    grid steps when possible so the 'parallel' N axis can shard across v7x's
    two TensorCores (no effect on single-TC v5e/v6e)."""
    if n >= 2 * _TN_MAX:
        return _TN_MAX
    return max(8, _round_up(pl.cdiv(n, 2), 8))


def embedding_sum(word, head, tail, tab_hi, tab_lo, *, vocab_size, pos_size,
                  word_dim, return_padded=False):
    """word/head/tail: [B, S] int.  Default returns [B, S, word_dim] f32.
    With return_padded=True, returns the raw lane-dense (N_pad, 128) kernel
    output so the consumer can fuse the [:N, :word_dim] slice/reshape into its
    next op instead of paying a second full HBM pass here."""
    B, S = word.shape
    N = B * S
    Vp, Dp = tab_hi.shape

    # Pack the three index streams into one (N, 3) array, pre-offset into the
    # fused table so the kernel needs no per-table bookkeeping.
    idx = jnp.stack(
        [word.reshape(N).astype(jnp.int32),
         head.reshape(N).astype(jnp.int32) + vocab_size,
         tail.reshape(N).astype(jnp.int32) + vocab_size + pos_size],
        axis=1)                                               # (N, 3)

    TN = _pick_row_tile(N)
    N_pad = _round_up(N, TN)
    if N_pad != N:
        # Padded rows get idx (0,0,0): all three hits land on fused row 0 (the
        # zeroed padding_idx word row) so they produce zeros; they are sliced
        # off below anyway.  NOTE: relies on padding_idx == 0.
        idx = jnp.pad(idx, ((0, N_pad - N), (0, 0)))

    # VMEM @ TN=1024: out 2x512 KiB + idx 2x512 KiB (the (TN,3) i32 tile lane-
    # pads to 128 lanes) + tables 2x64 KiB (single-buffered bf16) + bf16 one-hot
    # staging ~512 KiB  ~= 2.7 MiB -> fits every generation's *default* scoped-
    # VMEM limit, so no vmem_limit_bytes override.
    out = pl.pallas_call(
        _embed_sum_kernel,
        out_shape=jax.ShapeDtypeStruct((N_pad, Dp), jnp.float32),
        grid=(N_pad // TN,),
        in_specs=[
            pl.BlockSpec((TN, 3), lambda i: (i, 0)),          # packed indices
            # Fused table halves are constant across the grid: keep them
            # VMEM-resident and single-buffered (no dead double buffer).
            pl.BlockSpec((Vp, Dp), lambda i: (0, 0),
                         pipeline_mode=pl.Buffered(1)),
            pl.BlockSpec((Vp, Dp), lambda i: (0, 0),
                         pipeline_mode=pl.Buffered(1)),
        ],
        out_specs=pl.BlockSpec((TN, Dp), lambda i: (i, 0)),   # lane-dense store
        compiler_params=pltpu.CompilerParams(
            dimension_semantics=("parallel",),
        ),
    )(idx, tab_hi, tab_lo)

    if return_padded:
        return out                                            # (N_pad, Dp)
    return out[:N, :word_dim].reshape(B, S, word_dim)


def init_params(key, vocab_size, word_dim=60, pos_size=62, pos_dim=60):
    """nn.Embedding-style init (N(0,1)), padding_idx=0 row zeroed."""
    k1, k2, k3 = jax.random.split(key, 3)
    word_tab = jax.random.normal(k1, (vocab_size, word_dim), jnp.float32)
    head_tab = jax.random.normal(k2, (pos_size, pos_dim), jnp.float32)
    tail_tab = jax.random.normal(k3, (pos_size, pos_dim), jnp.float32)
    # padding_idx=0 -> embedding row 0 is zeros (forward semantics; no VJP here).
    word_tab = word_tab.at[0].set(0.0)
    head_tab = head_tab.at[0].set(0.0)
    tail_tab = tail_tab.at[0].set(0.0)
    return word_tab, head_tab, tail_tab


if __name__ == "__main__":
    vocab_size = 32
    pos_size = 62
    word_dim = 60
    B, S = 2, 8

    key = jax.random.PRNGKey(0)
    kp, kw, kh, kt = jax.random.split(key, 4)

    word_tab, head_tab, tail_tab = init_params(kp, vocab_size)
    tab_hi, tab_lo = build_fused_tables(word_tab, head_tab, tail_tab)

    word = jax.random.randint(kw, (B, S), 0, vocab_size, dtype=jnp.int32)
    head = jax.random.randint(kh, (B, S), 0, pos_size, dtype=jnp.int32)
    tail = jax.random.randint(kt, (B, S), 0, pos_size, dtype=jnp.int32)

    out = embedding_sum(word, head, tail, tab_hi, tab_lo,
                        vocab_size=vocab_size, pos_size=pos_size,
                        word_dim=word_dim)
    out = jax.block_until_ready(out)

    # Reference check in plain JAX (take-based gather + sum) against the f32
    # tables; the bf16 hi/lo split reconstructs them to ~|x|*2^-18 per entry.
    ref = (jnp.take(word_tab, word, axis=0)
           + jnp.take(head_tab, head, axis=0)
           + jnp.take(tail_tab, tail, axis=0))
    assert out.shape == (B, S, word_dim), out.shape
    assert jnp.allclose(out, ref, atol=2e-4), "mismatch vs reference"

    print("KERNEL_OK")
</pallas_src>

<mosaic_0001>
module attributes {stable_mosaic.version = 11 : i64} {
  func.func @_embed_sum_kernel(%arg0: i32, %arg1: memref<8x3xi32, #tpu.memory_space<vmem>>, %arg2: memref<256x128xbf16, #tpu.memory_space<vmem>>, %arg3: memref<256x128xbf16, #tpu.memory_space<vmem>>, %arg4: memref<8x128xf32, #tpu.memory_space<vmem>>) attributes {dimension_semantics = [#tpu.dimension_semantics<parallel>], iteration_bounds = array<i64: 2>, scalar_prefetch = 0 : i64, scratch_operands = 0 : i64, tpu.core_type = #tpu.core_type<tc>, window_params = [{transform_indices = @transform_0, window_bounds = array<i64: 8, 3>}, {pipeline_mode = #tpu.pipeline_mode<synchronous>, transform_indices = @transform_1, window_bounds = array<i64: 256, 128>}, {pipeline_mode = #tpu.pipeline_mode<synchronous>, transform_indices = @transform_2, window_bounds = array<i64: 256, 128>}, {transform_indices = @transform_3, window_bounds = array<i64: 8, 128>}]} {
    %c0 = arith.constant 0 : index
    %c0_0 = arith.constant 0 : index
    %0 = vector.load %arg1[%c0, %c0_0] : memref<8x3xi32, #tpu.memory_space<vmem>>, vector<8x3xi32>
    %1 = tpu.iota {dimensions = array<i32: 1>} : vector<8x256xi32>
    %2 = vector.extract_strided_slice %0 {offsets = [0, 0], sizes = [8, 1], strides = [1, 1]} : vector<8x3xi32> to vector<8x1xi32>
    %3 = vector.broadcast %2 : vector<8x1xi32> to vector<8x256xi32>
    %4 = arith.cmpi eq, %1, %3 : vector<8x256xi32>
    %5 = vector.extract_strided_slice %0 {offsets = [0, 1], sizes = [8, 1], strides = [1, 1]} : vector<8x3xi32> to vector<8x1xi32>
    %6 = vector.broadcast %5 : vector<8x1xi32> to vector<8x256xi32>
    %7 = arith.cmpi eq, %1, %6 : vector<8x256xi32>
    %8 = arith.ori %4, %7 : vector<8x256xi1>
    %9 = vector.extract_strided_slice %0 {offsets = [0, 2], sizes = [8, 1], strides = [1, 1]} : vector<8x3xi32> to vector<8x1xi32>
    %10 = vector.broadcast %9 : vector<8x1xi32> to vector<8x256xi32>
    %11 = arith.cmpi eq, %1, %10 : vector<8x256xi32>
    %12 = arith.ori %8, %11 : vector<8x256xi1>
    %13 = arith.extui %12 : vector<8x256xi1> to vector<8x256xi32>
    %14 = arith.sitofp %13 : vector<8x256xi32> to vector<8x256xf32>
    %15 = arith.truncf %14 : vector<8x256xf32> to vector<8x256xbf16>
    %c0_1 = arith.constant 0 : index
    %c0_2 = arith.constant 0 : index
    %16 = vector.load %arg2[%c0_1, %c0_2] : memref<256x128xbf16, #tpu.memory_space<vmem>>, vector<256x128xbf16>
    %cst = arith.constant dense<0.000000e+00> : vector<8x128xf32>
    %17 = tpu.matmul %15, %16, %cst {dimension_numbers = #tpu.dot_dimension_numbers<[1], [0], [0], [1], [0, 0, 1, 1], [], []>} : vector<8x256xbf16>, vector<256x128xbf16>, vector<8x128xf32> -> vector<8x128xf32>
    %c0_3 = arith.constant 0 : index
    %c0_4 = arith.constant 0 : index
    %18 = vector.load %arg3[%c0_3, %c0_4] : memref<256x128xbf16, #tpu.memory_space<vmem>>, vector<256x128xbf16>
    %cst_5 = arith.constant dense<0.000000e+00> : vector<8x128xf32>
    %19 = tpu.matmul %15, %18, %cst_5 {dimension_numbers = #tpu.dot_dimension_numbers<[1], [0], [0], [1], [0, 0, 1, 1], [], []>} : vector<8x256xbf16>, vector<256x128xbf16>, vector<8x128xf32> -> vector<8x128xf32>
    %20 = arith.addf %17, %19 : vector<8x128xf32>
    %c0_6 = arith.constant 0 : index
    %c0_7 = arith.constant 0 : index
    %21 = vector.load %arg4[%c0_6, %c0_7] : memref<8x128xf32, #tpu.memory_space<vmem>>, vector<8x128xf32>
    tpu.vector_store %arg4[%c0_6, %c0_7], %20 {strides = array<i32>} : memref<8x128xf32, #tpu.memory_space<vmem>>, vector<8x128xf32>,
    return
  }
  func.func @transform_0(%arg0: i32) -> (i32, i32) {
    %c0_i32 = arith.constant 0 : i32
    %c0_i32_0 = arith.constant 0 : i32
    return %arg0, %c0_i32 : i32, i32
  }
  func.func @transform_1(%arg0: i32) -> (i32, i32) {
    %c0_i32 = arith.constant 0 : i32
    %c0_i32_0 = arith.constant 0 : i32
    %c0_i32_1 = arith.constant 0 : i32
    return %c0_i32, %c0_i32_0 : i32, i32
  }
  func.func @transform_2(%arg0: i32) -> (i32, i32) {
    %c0_i32 = arith.constant 0 : i32
    %c0_i32_0 = arith.constant 0 : i32
    %c0_i32_1 = arith.constant 0 : i32
    return %c0_i32, %c0_i32_0 : i32, i32
  }
  func.func @transform_3(%arg0: i32) -> (i32, i32) {
    %c0_i32 = arith.constant 0 : i32
    %c0_i32_0 = arith.constant 0 : i32
    return %arg0, %c0_i32 : i32, i32
  }
}

</mosaic_0001>

<llo_original>
// kernel: tpu_custom_call.1
$region0: #{tpu_custom_call.1}
  #allocation0 [shape = 'u32[]', space=smem, size = 0x4, offset = 0x4, fixed_abs, tag = 'smem constant byte address 0x4 - core index']
  #allocation1 [shape = 'u32[144,128]{1,0:T(1,128)}', space=vmem, size = 0x12000, scoped, tag = 'internal scratch']
  %s0 = inlined_call_operand.vmem [shape: s32[16,3], index: 0, kind: input, shape index: {}]
  %s1 = inlined_call_operand.hbm [shape: bf16[256,128], index: 1, kind: input, shape index: {}]
  %s2 = inlined_call_operand.hbm [shape: bf16[256,128], index: 2, kind: input, shape index: {}]
  %s3 = inlined_call_operand.hbm [shape: f32[16,128], index: 3, kind: output, shape index: {}]
  %s4 = sld [smem:[#allocation0]]
  $region53: #{tpu_custom_call.1} parent=0
    _
  %s6 = ssub.s32 1, %s4
  %s7 = scalar_select 0, %s6, %s4
  $region1: #{tpu_custom_call.1} parent=0
    #allocation2 [shape = 'u8[65536]{0}', space=vmem, size = 0x10000, scoped, tag = 'input window, operand 1, single buffered']
    #allocation3 [shape = 's32[2]{0}', space=sflag, size = 0x8, scoped, tag = 'scoped memory for tpu_custom_call.1']
    #allocation4 [shape = 's32[2]{0}', space=sflag, size = 0x8, scoped, tag = 'scoped memory for tpu_custom_call.1']
    #allocation5 [shape = 'u8[65536]{0}', space=vmem, size = 0x10000, scoped, tag = 'input window, operand 2, single buffered']
    #allocation6 [shape = 's32[1]{0}', space=sflag, size = 0x4, scoped, tag = 'scoped memory for tpu_custom_call.1']
    #allocation7 [shape = 'u8[8192]{0}', space=vmem, size = 0x2000, scoped, tag = 'output window, operand 0']
    %8 = vsyncpa [#allocation3], 0
    %9 = vsyncpa [#allocation6], 0
    %10 = vsyncpa [#allocation4], 0
    %s11 = scalar_lea.sflag [#allocation4], 1
    %12 = vsyncpa %s11, 0
    loop: start=0, step=1, limit=4
    $region2: #{tpu_custom_call.1} parent=1 // loop_pre_header
      _
    $region3: #{tpu_custom_call.1} parent=1 // loop_header
      %s14 = sphi 0, %s18
      %p15 = scmp.ge.s32.totalorder %s14, 4
      %s24 = sphi 0, %s26
      %s27 = sphi 0, %s24
      %s28 = sphi 0, %s27
      %s44 = sphi 0, %s28
      %s48 = sphi 0, %s48
      %s50 = sphi 0, %s48
      %s51 = sphi 0, %s50
      %s65 = sphi 0, %s51
      %s69 = sphi 0, %s69
      %s71 = sphi 0, %s69
      %s72 = sphi 0, %s71
      %s86 = sphi 0, %s72
      %s92 = sphi 0, %s94
      %s95 = sphi 0, %s92
      %s96 = sphi 0, %s95
      %s112 = sphi 0, %s96
    $region4: #{tpu_custom_call.1} parent=1 // loop_header_branch
      %17 = sbr.rel (%p15) target = $region8
    $region5: #{tpu_custom_call.1} parent=1 // loop_body
      %s19 = ssub.s32 %s14, 1
      %s20 = ssub.s32 %s14, 2
      %s21 = sadd.s32 %s14, 1
      %s22 = ssub.s32 %s14, %s21
      %p23 = scmp.eq.s32.totalorder %s22, 0
      %s25 = sadd.s32 %s24, 1
      %s26 = scalar_select %p23, %s24, %s25
      %p29 = pneg %p23
      %p30 = scmp.eq.s32.totalorder %s14, 1
      %p31 = por %p29, %p30
      %p32 = scmp.ne.s32.totalorder %s24, %s27
      %p33 = scmp.eq.s32.totalorder %s14, 0
      %p34 = por %p32, %p33
      %p35 = scmp.ne.s32.totalorder %s24, %s27
      %p36 = scmp.eq.s32.totalorder %s19, 1
      %p37 = por %p35, %p36
      %p38 = scmp.ne.s32.totalorder %s27, %s28
      %p39 = scmp.eq.s32.totalorder %s19, 0
      %p40 = por %p38, %p39
      %p41 = scmp.ne.s32.totalorder %s27, %s28
      %p42 = scmp.eq.s32.totalorder %s20, 1
      %p43 = por %p41, %p42
      %p45 = scmp.ne.s32.totalorder %s28, %s44
      %p46 = scmp.eq.s32.totalorder %s20, 0
      %p47 = por %p45, %p46
      %s49 = sadd.s32 %s48, 1
      %p52 = scmp.eq.s32.totalorder %s14, 1
      %p53 = scmp.ne.s32.totalorder %s48, %s50
      %p54 = scmp.eq.s32.totalorder %s14, 0
      %p55 = por %p53, %p54
      %p56 = scmp.ne.s32.totalorder %s48, %s50
      %p57 = scmp.eq.s32.totalorder %s19, 1
      %p58 = por %p56, %p57
      %p59 = scmp.ne.s32.totalorder %s50, %s51
      %p60 = scmp.eq.s32.totalorder %s19, 0
      %p61 = por %p59, %p60
      %p62 = scmp.ne.s32.totalorder %s50, %s51
      %p63 = scmp.eq.s32.totalorder %s20, 1
      %p64 = por %p62, %p63
      %p66 = scmp.ne.s32.totalorder %s51, %s65
      %p67 = scmp.eq.s32.totalorder %s20, 0
      %p68 = por %p66, %p67
      %s70 = sadd.s32 %s69, 1
      %p73 = scmp.eq.s32.totalorder %s14, 1
      %p74 = scmp.ne.s32.totalorder %s69, %s71
      %p75 = scmp.eq.s32.totalorder %s14, 0
      %p76 = por %p74, %p75
      %p77 = scmp.ne.s32.totalorder %s69, %s71
      %p78 = scmp.eq.s32.totalorder %s19, 1
      %p79 = por %p77, %p78
      %p80 = scmp.ne.s32.totalorder %s71, %s72
      %p81 = scmp.eq.s32.totalorder %s19, 0
      %p82 = por %p80, %p81
      %p83 = scmp.ne.s32.totalorder %s71, %s72
      %p84 = scmp.eq.s32.totalorder %s20, 1
      %p85 = por %p83, %p84
      %p87 = scmp.ne.s32.totalorder %s72, %s86
      %p88 = scmp.eq.s32.totalorder %s20, 0
      %p89 = por %p87, %p88
      %s90 = ssub.s32 %s14, %s21
      %p91 = scmp.eq.s32.totalorder %s90, 0
      %s93 = sadd.s32 %s92, 1
      %s94 = scalar_select %p91, %s92, %s93
      %p97 = pneg %p91
      %p98 = scmp.eq.s32.totalorder %s14, 1
      %p99 = por %p97, %p98
      %p100 = scmp.ne.s32.totalorder %s92, %s95
      %p101 = scmp.eq.s32.totalorder %s14, 0
      %p102 = por %p100, %p101
      %p103 = scmp.ne.s32.totalorder %s92, %s95
      %p104 = scmp.eq.s32.totalorder %s19, 1
      %p105 = por %p103, %p104
      %p106 = scmp.ne.s32.totalorder %s95, %s96
      %p107 = scmp.eq.s32.totalorder %s19, 0
      %p108 = por %p106, %p107
      %p109 = scmp.ne.s32.totalorder %s95, %s96
      %p110 = scmp.eq.s32.totalorder %s20, 1
      %p111 = por %p109, %p110
      %p113 = scmp.ne.s32.totalorder %s96, %s112
      %p114 = scmp.eq.s32.totalorder %s20, 0
      %p115 = por %p113, %p114
      %p116 = scmp.le.s32.totalorder 1, %s14
      %p117 = scmp.lt.s32.totalorder %s14, 3
      %p118 = pnand %p116, %p117
      %p119 = pneg %p118
      // Predicated region
      $region9: #{tpu_custom_call.1} parent=5 // pred_check
        _
      $region10: #{tpu_custom_call.1} parent=5 // pred_check_branch
        %121 = sbr.rel (%p118) target = $region12
      $region11: #{tpu_custom_call.1} parent=5 // pred_region
        %s122 = ssub.s32 %s14, 1
        // Predicated region
        $region13: #{tpu_custom_call.1} parent=11 // pred_check
          %p123 = pneg %p61
        $region14: #{tpu_custom_call.1} parent=11 // pred_check_branch
          %125 = sbr.rel (%p123) target = $region16
        $region15: #{tpu_custom_call.1} parent=11 // pred_region
          %s127 = ssub.s32 2048, 2048
          %128 = vsyncadd [#allocation3], %s127
          %s129 = sshll.u32 [#allocation2], 4
          %s130 = int_to_ptr.vmem [resolvable:$true] %s129
          %135 = dma.hbm_to_vmem [thread:$0]  %s1, 2048, %s130, [#allocation3], 64, 64, 4
        $region16: #{tpu_custom_call.1} parent=11 // pred_fallthru
          _
        // Predicated region
        $region17: #{tpu_custom_call.1} parent=11 // pred_check
          %p136 = pneg %p82
        $region18: #{tpu_custom_call.1} parent=11 // pred_check_branch
          %138 = sbr.rel (%p136) target = $region20
        $region19: #{tpu_custom_call.1} parent=11 // pred_region
          %s140 = ssub.s32 2048, 2048
          %141 = vsyncadd [#allocation6], %s140
          %s142 = sshll.u32 [#allocation5], 4
          %s143 = int_to_ptr.vmem [resolvable:$true] %s142
          %148 = dma.hbm_to_vmem [thread:$0]  %s2, 2048, %s143, [#allocation6], 64, 64, 4
        $region20: #{tpu_custom_call.1} parent=11 // pred_fallthru
          _
      $region12: #{tpu_custom_call.1} parent=5 // pred_fallthru
        _
      %p149 = scmp.lt.s32.totalorder %s14, 2
      // Predicated region
      $region21: #{tpu_custom_call.1} parent=5 // pred_check
        %p150 = pneg %p149
      $region22: #{tpu_custom_call.1} parent=5 // pred_check_branch
        %152 = sbr.rel (%p150) target = $region24
      $region23: #{tpu_custom_call.1} parent=5 // pred_region
        // Predicated region
        $region25: #{tpu_custom_call.1} parent=23 // pred_check
          %p153 = pneg %p34
        $region26: #{tpu_custom_call.1} parent=23 // pred_check_branch
          %155 = sbr.rel (%p153) target = $region28
        $region27: #{tpu_custom_call.1} parent=23 // pred_region
          %p156 = scmp.lt.s32.totalorder %s14, 1
          %s157 = scalar_select %p156, %s14, 1
          %s158 = smul.addr %s157, 8
          %s159 = scalar_lea.vmem %s0, %s158
        $region28: #{tpu_custom_call.1} parent=23 // pred_fallthru
          _
      $region24: #{tpu_custom_call.1} parent=5 // pred_fallthru
        _
      %p160 = scmp.le.s32.totalorder 1, %s14
      %p161 = scmp.lt.s32.totalorder %s14, 3
      %p162 = pnand %p160, %p161
      %p163 = pneg %p162
      // Predicated region
      $region29: #{tpu_custom_call.1} parent=5 // pred_check
        _
      $region30: #{tpu_custom_call.1} parent=5 // pred_check_branch
        %165 = sbr.rel (%p162) target = $region32
      $region31: #{tpu_custom_call.1} parent=5 // pred_region
        %s166 = ssub.s32 %s14, 1
        // Predicated region
        $region33: #{tpu_custom_call.1} parent=31 // pred_check
          %p167 = pneg %p61
        $region34: #{tpu_custom_call.1} parent=31 // pred_check_branch
          %169 = sbr.rel (%p167) target = $region36
        $region35: #{tpu_custom_call.1} parent=31 // pred_region
          %170 = dma.done [#allocation3], 2048
        $region36: #{tpu_custom_call.1} parent=31 // pred_fallthru
          _
        // Predicated region
        $region37: #{tpu_custom_call.1} parent=31 // pred_check
          %p171 = pneg %p82
        $region38: #{tpu_custom_call.1} parent=31 // pred_check_branch
          %173 = sbr.rel (%p171) target = $region40
        $region39: #{tpu_custom_call.1} parent=31 // pred_region
          %174 = dma.done [#allocation6], 2048
        $region40: #{tpu_custom_call.1} parent=31 // pred_fallthru
          _
        %p175 = scmp.lt.s32.totalorder %s19, 1
        %s176 = scalar_select %p175, %s19, 1
        %s177 = smul.addr %s176, 8
        %s178 = scalar_lea.vmem %s0, %s177
        %p179 = pneg %p40
        %p180 = pneg %p37
        %p181 = pneg %p61
        %p182 = pneg %p58
        %p183 = pneg %p82
        %p184 = pneg %p79
        %p185 = pneg %p108
        %p186 = pneg %p105
        %s187 = sand.u32 %s95, 1
        %s188 = scalar_lea.sflag [#allocation4], %s187
        %s189 = sand.u32 %s95, 1
        %s190 = smul.addr %s189, 8
        %s191 = scalar_lea.vmem [#allocation7], %s190
        %p192 = scmp.lt.s32.totalorder %s19, 1
        %s193 = scalar_select %p192, %s19, 1
        %s194 = smul.addr %s193, 8
        %s195 = scalar_lea.vmem %s0, %s194
        %v197 = vld [vmem:[%s195] sm:$0xff]
        %v198 = vlaneseq
        %v199 = vand.u32 %v198, 127
        %v200 = vadd.s32 %v199, 128
        %201 = vset.pattern.permute.xlu0 0
        %202 = vperm.xlu0 %201, %v197
        %v203 = vpop.permute.xlu0 %202
        %vm204 = vcmp.eq.s32.totalorder %v199, %v203
        %vm205 = vcmp.eq.s32.totalorder %v200, %v203
        %206 = vset.pattern.permute.xlu0 1
        %207 = vperm.xlu0 %206, %v197
        %v208 = vpop.permute.xlu0 %207
        %vm209 = vcmp.eq.s32.totalorder %v199, %v208
        %vm210 = vcmp.eq.s32.totalorder %v200, %v208
        %vm211 = vmor %vm204, %vm209
        %vm212 = vmor %vm205, %vm210
        %213 = vset.pattern.permute.xlu0 2
        %214 = vperm.xlu0 %213, %v197
        %v215 = vpop.permute.xlu0 %214
        %vm216 = vcmp.eq.s32.totalorder %v199, %v215
        %vm217 = vcmp.eq.s32.totalorder %v200, %v215
        %vm218 = vmor %vm211, %vm216
        %vm219 = vmor %vm212, %vm217
        %v220 = vsel %vm218, 1, 0
        %v221 = vsel %vm219, 1, 0
        %v222 = vcvt.s32.f32 %v220
        %v223 = vcvt.s32.f32 %v221
        %v224 = vpack.c.bf16 %v222, %v222
        %v225 = vpack.c.bf16 %v223, %v223
        %v226 = vld [vmem:[#allocation2] sm:$0xf]
        %v227 = vld [vmem:[#allocation2 + $0x4] sm:$0xf]
        %v228 = vld [vmem:[#allocation2 + $0x8] sm:$0xf]
        %v229 = vld [vmem:[#allocation2 + $0xc] sm:$0xf]
        %v230 = vld [vmem:[#allocation2 + $0x10] sm:$0xf]
        %v231 = vld [vmem:[#allocation2 + $0x14] sm:$0xf]
        %v232 = vld [vmem:[#allocation2 + $0x18] sm:$0xf]
        %v233 = vld [vmem:[#allocation2 + $0x1c] sm:$0xf]
        %v234 = vld [vmem:[#allocation2 + $0x20] sm:$0xf]
        %v235 = vld [vmem:[#allocation2 + $0x24] sm:$0xf]
        %v236 = vld [vmem:[#allocation2 + $0x28] sm:$0xf]
        %v237 = vld [vmem:[#allocation2 + $0x2c] sm:$0xf]
        %v238 = vld [vmem:[#allocation2 + $0x30] sm:$0xf]
        %v239 = vld [vmem:[#allocation2 + $0x34] sm:$0xf]
        %v240 = vld [vmem:[#allocation2 + $0x38] sm:$0xf]
        %v241 = vld [vmem:[#allocation2 + $0x3c] sm:$0xf]
        %v242 = vld [vmem:[#allocation2 + $0x40] sm:$0xf]
        %v243 = vld [vmem:[#allocation2 + $0x44] sm:$0xf]
        %v244 = vld [vmem:[#allocation2 + $0x48] sm:$0xf]
        %v245 = vld [vmem:[#allocation2 + $0x4c] sm:$0xf]
        %v246 = vld [vmem:[#allocation2 + $0x50] sm:$0xf]
        %v247 = vld [vmem:[#allocation2 + $0x54] sm:$0xf]
        %v248 = vld [vmem:[#allocation2 + $0x58] sm:$0xf]
        %v249 = vld [vmem:[#allocation2 + $0x5c] sm:$0xf]
        %v250 = vld [vmem:[#allocation2 + $0x60] sm:$0xf]
        %v251 = vld [vmem:[#allocation2 + $0x64] sm:$0xf]
        %v252 = vld [vmem:[#allocation2 + $0x68] sm:$0xf]
        %v253 = vld [vmem:[#allocation2 + $0x6c] sm:$0xf]
        %v254 = vld [vmem:[#allocation2 + $0x70] sm:$0xf]
        %v255 = vld [vmem:[#allocation2 + $0x74] sm:$0xf]
        %v256 = vld [vmem:[#allocation2 + $0x78] sm:$0xf]
        %v257 = vld [vmem:[#allocation2 + $0x7c] sm:$0xf]
        %v258 = vld [vmem:[#allocation5] sm:$0xf]
        %v259 = vld [vmem:[#allocation5 + $0x4] sm:$0xf]
        %v260 = vld [vmem:[#allocation5 + $0x8] sm:$0xf]
        %v261 = vld [vmem:[#allocation5 + $0xc] sm:$0xf]
        %v262 = vld [vmem:[#allocation5 + $0x10] sm:$0xf]
        %v263 = vld [vmem:[#allocation5 + $0x14] sm:$0xf]
        %v264 = vld [vmem:[#allocation5 + $0x18] sm:$0xf]
        %v265 = vld [vmem:[#allocation5 + $0x1c] sm:$0xf]
        %v266 = vld [vmem:[#allocation5 + $0x20] sm:$0xf]
        %v267 = vld [vmem:[#allocation5 + $0x24] sm:$0xf]
        %v268 = vld [vmem:[#allocation5 + $0x28] sm:$0xf]
        %v269 = vld [vmem:[#allocation5 + $0x2c] sm:$0xf]
        %v270 = vld [vmem:[#allocation5 + $0x30] sm:$0xf]
        %v271 = vld [vmem:[#allocation5 + $0x34] sm:$0xf]
        %v272 = vld [vmem:[#allocation5 + $0x38] sm:$0xf]
        %v273 = vld [vmem:[#allocation5 + $0x3c] sm:$0xf]
        %v274 = vld [vmem:[#allocation5 + $0x40] sm:$0xf]
        %v275 = vld [vmem:[#allocation5 + $0x44] sm:$0xf]
        %v276 = vld [vmem:[#allocation5 + $0x48] sm:$0xf]
        %v277 = vld [vmem:[#allocation5 + $0x4c] sm:$0xf]
        %v278 = vld [vmem:[#allocation5 + $0x50] sm:$0xf]
        %v279 = vld [vmem:[#allocation5 + $0x54] sm:$0xf]
        %v280 = vld [vmem:[#allocation5 + $0x58] sm:$0xf]
        %v281 = vld [vmem:[#allocation5 + $0x5c] sm:$0xf]
        %v282 = vld [vmem:[#allocation5 + $0x60] sm:$0xf]
        %v283 = vld [vmem:[#allocation5 + $0x64] sm:$0xf]
        %v284 = vld [vmem:[#allocation5 + $0x68] sm:$0xf]
        %v285 = vld [vmem:[#allocation5 + $0x6c] sm:$0xf]
        %v286 = vld [vmem:[#allocation5 + $0x70] sm:$0xf]
        %v287 = vld [vmem:[#allocation5 + $0x74] sm:$0xf]
        %v288 = vld [vmem:[#allocation5 + $0x78] sm:$0xf]
        %v289 = vld [vmem:[#allocation5 + $0x7c] sm:$0xf]
        %v322 = vunpack.c.l.b16 %v258
        %v323 = vunpack.c.l.b16 %v259
        %v324 = vunpack.c.l.b16 %v260
        %v325 = vunpack.c.l.b16 %v261
        %v326 = vunpack.c.l.b16 %v262
        %v327 = vunpack.c.l.b16 %v263
        %v328 = vunpack.c.l.b16 %v264
        %v329 = vunpack.c.l.b16 %v265
        %v330 = vunpack.c.l.b16 %v266
        %v331 = vunpack.c.l.b16 %v267
        %v332 = vunpack.c.l.b16 %v268
        %v333 = vunpack.c.l.b16 %v269
        %v334 = vunpack.c.l.b16 %v270
        %v335 = vunpack.c.l.b16 %v271
        %v336 = vunpack.c.l.b16 %v272
        %v337 = vunpack.c.l.b16 %v273
        %v338 = vunpack.c.l.b16 %v274
        %v339 = vunpack.c.l.b16 %v275
        %v340 = vunpack.c.l.b16 %v276
        %v341 = vunpack.c.l.b16 %v277
        %v342 = vunpack.c.l.b16 %v278
        %v343 = vunpack.c.l.b16 %v279
        %v344 = vunpack.c.l.b16 %v280
        %v345 = vunpack.c.l.b16 %v281
        %v346 = vunpack.c.l.b16 %v282
        %v347 = vunpack.c.l.b16 %v283
        %v348 = vunpack.c.l.b16 %v284
        %v349 = vunpack.c.l.b16 %v285
        %v350 = vunpack.c.l.b16 %v286
        %v351 = vunpack.c.l.b16 %v287
        %v352 = vunpack.c.l.b16 %v288
        %v353 = vunpack.c.l.b16 %v289
        %v354 = vpack.c.b16 %v323, %v322
        %v355 = vpack.c.b16 %v325, %v324
        %v356 = vpack.c.b16 %v327, %v326
        %v357 = vpack.c.b16 %v329, %v328
        %v358 = vpack.c.b16 %v331, %v330
        %v359 = vpack.c.b16 %v333, %v332
        %v360 = vpack.c.b16 %v335, %v334
        %v361 = vpack.c.b16 %v337, %v336
        %v362 = vpack.c.b16 %v339, %v338
        %v363 = vpack.c.b16 %v341, %v340
        %v364 = vpack.c.b16 %v343, %v342
        %v365 = vpack.c.b16 %v345, %v344
        %v366 = vpack.c.b16 %v347, %v346
        %v367 = vpack.c.b16 %v349, %v348
        %v368 = vpack.c.b16 %v351, %v350
        %v369 = vpack.c.b16 %v353, %v352
        %386 = vmatprep.subr.bf16.mxu0 0
        %387 = vmatpush1.bf16.msra.mxu0 %v354
        %388 = vmatprep.subr.bf16.mxu0 0
        %389 = vmatpush1.bf16.msra.mxu0 %v355
        %390 = vmatprep.subr.bf16.mxu0 0
        %391 = vmatpush1.bf16.msra.mxu0 %v356
        %392 = vmatprep.subr.bf16.mxu0 0
        %393 = vmatpush1.bf16.msra.mxu0 %v357
        %394 = vmatprep.subr.bf16.mxu0 0
        %395 = vmatpush1.bf16.msra.mxu0 %v358
        %396 = vmatprep.subr.bf16.mxu0 0
        %397 = vmatpush1.bf16.msra.mxu0 %v359
        %398 = vmatprep.subr.bf16.mxu0 0
        %399 = vmatpush1.bf16.msra.mxu0 %v360
        %400 = vmatprep.subr.bf16.mxu0 0
        %401 = vmatpush1.bf16.msra.mxu0 %v361
        %402 = vmatprep.subr.bf16.mxu0 0
        %403 = vmatpush1.bf16.msra.mxu0 %v362
        %404 = vmatprep.subr.bf16.mxu0 0
        %405 = vmatpush1.bf16.msra.mxu0 %v363
        %406 = vmatprep.subr.bf16.mxu0 0
        %407 = vmatpush1.bf16.msra.mxu0 %v364
        %408 = vmatprep.subr.bf16.mxu0 0
        %409 = vmatpush1.bf16.msra.mxu0 %v365
        %410 = vmatprep.subr.bf16.mxu0 0
        %411 = vmatpush1.bf16.msra.mxu0 %v366
        %412 = vmatprep.subr.bf16.mxu0 0
        %413 = vmatpush1.bf16.msra.mxu0 %v367
        %414 = vmatprep.subr.bf16.mxu0 0
        %415 = vmatpush1.bf16.msra.mxu0 %v368
        %416 = vmatprep.subr.bf16.mxu0 0
        %417 = vmatpush1.bf16.msra.mxu0 %v369
        %418 = vmatprep.mubr.bf16.mxu0 %v225
        %419 = vmatmul.mubr.bf16.gmra.mrb[0].mxu0 %v224
        %v420 = vpop.f32.mrb[0].mxu0
        %v421 = vadd.f32 0.0, %v420
        %v422 = vpop.f32.mrb[0].mxu0
        %v423 = vpop.f32.mrb[0].mxu0
        %v424 = vpop.f32.mrb[0].mxu0
        %425 = vdwg.mxu0
        %v458 = vunpack.c.l.b16 %v226
        %v459 = vunpack.c.l.b16 %v227
        %v460 = vunpack.c.l.b16 %v228
        %v461 = vunpack.c.l.b16 %v229
        %v462 = vunpack.c.l.b16 %v230
        %v463 = vunpack.c.l.b16 %v231
        %v464 = vunpack.c.l.b16 %v232
        %v465 = vunpack.c.l.b16 %v233
        %v466 = vunpack.c.l.b16 %v234
        %v467 = vunpack.c.l.b16 %v235
        %v468 = vunpack.c.l.b16 %v236
        %v469 = vunpack.c.l.b16 %v237
        %v470 = vunpack.c.l.b16 %v238
        %v471 = vunpack.c.l.b16 %v239
        %v472 = vunpack.c.l.b16 %v240
        %v473 = vunpack.c.l.b16 %v241
        %v474 = vunpack.c.l.b16 %v242
        %v475 = vunpack.c.l.b16 %v243
        %v476 = vunpack.c.l.b16 %v244
        %v477 = vunpack.c.l.b16 %v245
        %v478 = vunpack.c.l.b16 %v246
        %v479 = vunpack.c.l.b16 %v247
        %v480 = vunpack.c.l.b16 %v248
        %v481 = vunpack.c.l.b16 %v249
        %v482 = vunpack.c.l.b16 %v250
        %v483 = vunpack.c.l.b16 %v251
        %v484 = vunpack.c.l.b16 %v252
        %v485 = vunpack.c.l.b16 %v253
        %v486 = vunpack.c.l.b16 %v254
        %v487 = vunpack.c.l.b16 %v255
        %v488 = vunpack.c.l.b16 %v256
        %v489 = vunpack.c.l.b16 %v257
        %v490 = vpack.c.b16 %v459, %v458
        %v491 = vpack.c.b16 %v461, %v460
        %v492 = vpack.c.b16 %v463, %v462
        %v493 = vpack.c.b16 %v465, %v464
        %v494 = vpack.c.b16 %v467, %v466
        %v495 = vpack.c.b16 %v469, %v468
        %v496 = vpack.c.b16 %v471, %v470
        %v497 = vpack.c.b16 %v473, %v472
        %v498 = vpack.c.b16 %v475, %v474
        %v499 = vpack.c.b16 %v477, %v476
        %v500 = vpack.c.b16 %v479, %v478
        %v501 = vpack.c.b16 %v481, %v480
        %v502 = vpack.c.b16 %v483, %v482
        %v503 = vpack.c.b16 %v485, %v484
        %v504 = vpack.c.b16 %v487, %v486
        %v505 = vpack.c.b16 %v489, %v488
        %522 = vmatprep.subr.bf16.mxu0 0
        %523 = vmatpush1.bf16.msra.mxu0 %v490
        %524 = vmatprep.subr.bf16.mxu0 0
        %525 = vmatpush1.bf16.msra.mxu0 %v491
        %526 = vmatprep.subr.bf16.mxu0 0
        %527 = vmatpush1.bf16.msra.mxu0 %v492
        %528 = vmatprep.subr.bf16.mxu0 0
        %529 = vmatpush1.bf16.msra.mxu0 %v493
        %530 = vmatprep.subr.bf16.mxu0 0
        %531 = vmatpush1.bf16.msra.mxu0 %v494
        %532 = vmatprep.subr.bf16.mxu0 0
        %533 = vmatpush1.bf16.msra.mxu0 %v495
        %534 = vmatprep.subr.bf16.mxu0 0
        %535 = vmatpush1.bf16.msra.mxu0 %v496
        %536 = vmatprep.subr.bf16.mxu0 0
        %537 = vmatpush1.bf16.msra.mxu0 %v497
        %538 = vmatprep.subr.bf16.mxu0 0
        %539 = vmatpush1.bf16.msra.mxu0 %v498
        %540 = vmatprep.subr.bf16.mxu0 0
        %541 = vmatpush1.bf16.msra.mxu0 %v499
        %542 = vmatprep.subr.bf16.mxu0 0
        %543 = vmatpush1.bf16.msra.mxu0 %v500
        %544 = vmatprep.subr.bf16.mxu0 0
        %545 = vmatpush1.bf16.msra.mxu0 %v501
        %546 = vmatprep.subr.bf16.mxu0 0
        %547 = vmatpush1.bf16.msra.mxu0 %v502
        %548 = vmatprep.subr.bf16.mxu0 0
        %549 = vmatpush1.bf16.msra.mxu0 %v503
        %550 = vmatprep.subr.bf16.mxu0 0
        %551 = vmatpush1.bf16.msra.mxu0 %v504
        %552 = vmatprep.subr.bf16.mxu0 0
        %553 = vmatpush1.bf16.msra.mxu0 %v505
        %554 = vmatprep.mubr.bf16.mxu0 %v225
        %555 = vmatmul.mubr.bf16.gmra.mrb[0].mxu0 %v224
        %v556 = vpop.f32.mrb[0].mxu0
        %v557 = vadd.f32 %v421, %v556
        %v558 = vpop.f32.mrb[0].mxu0
        %v559 = vpop.f32.mrb[0].mxu0
        %v560 = vpop.f32.mrb[0].mxu0
        %561 = vdwg.mxu0
        %562 = vst [vmem:[%s191] sm:$0xff] %v557
        %s563 = sand.u32 %s95, 1
        %s564 = scalar_lea.sflag [#allocation4], %s563
        %s565 = sand.u32 %s95, 1
        %s566 = smul.addr %s565, 8
        %s567 = scalar_lea.vmem [#allocation7], %s566
        // Predicated region
        $region41: #{tpu_custom_call.1} parent=31 // pred_check
          %p568 = pneg %p105
        $region42: #{tpu_custom_call.1} parent=31 // pred_check_branch
          %570 = sbr.rel (%p568) target = $region44
        $region43: #{tpu_custom_call.1} parent=31 // pred_region
          %s572 = ssub.s32 128, 128
          %573 = vsyncadd %s564, %s572
          %s574 = smul.addr %s19, 128
          %s575 = scalar_lea.hbm %s3, %s574
          %s577 = sshll.u32 %s567, 4
          %s578 = int_to_ptr.vmem [resolvable:$true] %s577
          %580 = dma.vmem_to_hbm [thread:$0]  %s578, 128, %s575, %s564
        $region44: #{tpu_custom_call.1} parent=31 // pred_fallthru
          _
      $region32: #{tpu_custom_call.1} parent=5 // pred_fallthru
        _
      %p581 = scmp.le.s32.totalorder 2, %s14
      // Predicated region
      $region45: #{tpu_custom_call.1} parent=5 // pred_check
        %p582 = pneg %p581
      $region46: #{tpu_custom_call.1} parent=5 // pred_check_branch
        %584 = sbr.rel (%p582) target = $region48
      $region47: #{tpu_custom_call.1} parent=5 // pred_region
        %s585 = ssub.s32 %s14, 2
        // Predicated region
        $region49: #{tpu_custom_call.1} parent=47 // pred_check
          %p586 = pneg %p111
        $region50: #{tpu_custom_call.1} parent=47 // pred_check_branch
          %588 = sbr.rel (%p586) target = $region52
        $region51: #{tpu_custom_call.1} parent=47 // pred_region
          %s589 = sand.u32 %s96, 1
          %s590 = scalar_lea.sflag [#allocation4], %s589
          %s591 = sand.u32 %s96, 1
          %s592 = smul.addr %s591, 8
          %s593 = scalar_lea.vmem [#allocation7], %s592
          %594 = dma.done %s590, 128
        $region52: #{tpu_custom_call.1} parent=47 // pred_fallthru
          _
      $region48: #{tpu_custom_call.1} parent=5 // pred_fallthru
        _
    $region6: #{tpu_custom_call.1} parent=1 // loop_footer
      %s18 = sadd.s32 1, %s14
    $region7: #{tpu_custom_call.1} parent=1 // loop_footer_branch
      %13 = sbr.rel target = $region3
    $region8: #{tpu_custom_call.1} parent=1 // loop_exit
      _
    %595 = vsyncpa [#allocation3], 1
    %s596 = scalar_lea.sflag [#allocation3], 1
    %597 = vsyncpa %s596, 1
    %598 = vsyncpa [#allocation6], 1
    %599 = vsyncpa [#allocation4], 1
    %s600 = scalar_lea.sflag [#allocation4], 1
    %601 = vsyncpa %s600, 1

</llo_original>
